<compile_context>
chip_gen: v7x
topology: tpu7x:2x2x1
jax: 0.10.0
libtpu: 0.0.40
codegen_flags: <defaults>
</compile_context>

<pallas_src>
import jax
import jax.numpy as jnp
from jax.experimental import pallas as pl
from jax.experimental.pallas import tpu as pltpu

LANES = 128
TILE_BYTES = 2 * 1024 * 1024  # per-input tile; x2 inputs x2 buffers = 8 MiB VMEM


def _make_mse_sum_kernel(rows, row_tile, blocks_per_core, n_blocks,
                         needs_row_mask, has_dup):
    """Kernel accumulating sum((x - t)^2) into one SMEM scalar per core-split."""
    sub_blocks = row_tile // 8  # row_tile is always a multiple of 8

    def kernel(x_ref, t_ref, out_ref, acc_ref):
        c = pl.program_id(0)            # core-split axis ("parallel")
        i = pl.program_id(1)            # streaming axis ("arbitrary")
        blk = c * blocks_per_core + i   # logical block index over the row slab

        @pl.when(i == 0)
        def _():
            acc_ref[...] = jnp.zeros_like(acc_ref)

        def accumulate(mask_rows):
            d = x_ref[...].astype(jnp.float32) - t_ref[...].astype(jnp.float32)
            sq = d * d
            if mask_rows:
                # Row-only mask (lane pad was zero-filled => contributes 0).
                # jnp.where is a select, so garbage/NaN in the undefined tail
                # rows cannot propagate.
                row_ids = jax.lax.broadcasted_iota(
                    jnp.int32, (row_tile, LANES), 0)
                sq = jnp.where(blk * row_tile + row_ids < rows, sq,
                               jnp.float32(0.0))
            # Vreg-wise partial sums: (row_tile,128) -> (row_tile//8,8,128),
            # reduce over the leading axis (VPU adds only), accumulate in VMEM.
            acc_ref[...] += sq.reshape(sub_blocks, 8, LANES).sum(axis=0)

        if needs_row_mask:
            # Fast 3-op path for interior blocks; mask only the final (possibly
            # partial) block. Clamped duplicate blocks (blk >= n_blocks, only
            # when the block count is odd) match neither predicate => skipped.
            @pl.when(blk < n_blocks - 1)
            def _():
                accumulate(False)

            @pl.when(blk == n_blocks - 1)
            def _():
                accumulate(True)
        elif has_dup:
            @pl.when(blk < n_blocks)
            def _():
                accumulate(False)
        else:
            accumulate(False)

        # Single cross-lane/sublane reduction + scalar store per core,
        # last step only.
        @pl.when(i == pl.num_programs(1) - 1)
        def _():
            out_ref[0, 0] = jnp.sum(acc_ref[...])

    return kernel


def content_loss_forward(x, target):
    """Returns (x, loss) where loss = mean((x - target)^2) over all elements.

    Mirrors ContentLoss.forward: returns x unchanged; the loss (the module's
    `self.loss` side product) is returned explicitly.
    """
    assert x.shape == target.shape, "input / target shape mismatch"
    n_elems = x.size

    itemsize = max(jnp.dtype(x.dtype).itemsize, jnp.dtype(target.dtype).itemsize)
    sub = max(8, 32 // itemsize)  # native sublane packing: f32->8, bf16->16, i8->32

    flat_x = x.reshape(-1)
    flat_t = target.reshape(-1)

    rows = -(-n_elems // LANES)
    lane_pad = rows * LANES - n_elems
    if lane_pad:
        # Rare fallback: element count not a multiple of 128. Pad values are
        # zeros, so (0-0)^2 contributes nothing and no lane mask is needed.
        flat_x = jnp.pad(flat_x, (0, lane_pad))
        flat_t = jnp.pad(flat_t, (0, lane_pad))

    x2d = flat_x.reshape(rows, LANES)
    t2d = flat_t.reshape(rows, LANES)

    # ~2 MiB streaming tiles (dtype-dependent row count), clamped for small
    # inputs, always a multiple of the native sublane packing (and of 8).
    max_row_tile = TILE_BYTES // (LANES * itemsize)
    row_tile = min(max_row_tile, -(-rows // sub) * sub)
    n_blocks = -(-rows // row_tile)

    # Two-way split of the row stream for v7x megacore (leading "parallel"
    # axis, per-core partial sums); a cheap serial no-op on v5e/v6e.
    # TODO(synk): could gate num_splits on pltpu.get_tpu_info() core count.
    num_splits = 2 if n_blocks >= 2 else 1
    blocks_per_core = -(-n_blocks // num_splits)
    has_dup = num_splits * blocks_per_core != n_blocks
    needs_row_mask = n_blocks * row_tile != rows

    if has_dup:
        def in_map(c, i):
            # Clamp so the duplicate tail step DMAs in-bounds data; its
            # contribution is skipped inside the kernel.
            return (jnp.minimum(c * blocks_per_core + i, n_blocks - 1), 0)
    else:
        def in_map(c, i):
            return (c * blocks_per_core + i, 0)

    kernel = _make_mse_sum_kernel(rows, row_tile, blocks_per_core, n_blocks,
                                  needs_row_mask, has_dup)

    bytes_accessed = int(n_elems) * (jnp.dtype(x.dtype).itemsize
                                     + jnp.dtype(target.dtype).itemsize)

    partial_sums = pl.pallas_call(
        kernel,
        out_shape=jax.ShapeDtypeStruct((num_splits, 1), jnp.float32),
        grid_spec=pltpu.PrefetchScalarGridSpec(
            num_scalar_prefetch=0,
            grid=(num_splits, blocks_per_core),
            in_specs=[
                pl.BlockSpec((row_tile, LANES), in_map),
                pl.BlockSpec((row_tile, LANES), in_map),
            ],
            out_specs=pl.BlockSpec(
                (1, 1), lambda c, i: (c, 0), memory_space=pltpu.SMEM
            ),
            scratch_shapes=[pltpu.VMEM((8, LANES), jnp.float32)],
        ),
        compiler_params=pltpu.CompilerParams(
            dimension_semantics=("parallel", "arbitrary"),
        ),
        cost_estimate=pl.CostEstimate(
            flops=3 * int(n_elems),
            transcendentals=0,
            bytes_accessed=bytes_accessed,
        ),
    )(x2d, t2d)

    loss = jnp.sum(partial_sums) / jnp.float32(n_elems)
    # ContentLoss.forward returns the input unchanged (loss is a side product).
    return x, loss


def _check(x, t, rtol=1e-5, atol=1e-6):
    out, loss = content_loss_forward(x, t)
    jax.block_until_ready(out)
    jax.block_until_ready(loss)
    ref = jnp.mean((x.astype(jnp.float32) - t.astype(jnp.float32)) ** 2)
    assert jnp.allclose(loss, ref, rtol=rtol, atol=atol), (loss, ref)
    assert jnp.array_equal(out, x)


if __name__ == "__main__":
    key = jax.random.PRNGKey(0)

    # Main small NCHW feature maps consistent with the module.
    kx, kt = jax.random.split(key)
    x = jax.random.normal(kx, (2, 4, 16, 16), dtype=jnp.float32)
    target = jax.random.normal(kt, (2, 4, 16, 16), dtype=jnp.float32)
    _check(x, target)

    # Masked-tail path: element count not a multiple of 128 nor of the tile.
    kx2, kt2 = jax.random.split(jax.random.PRNGKey(1))
    x2 = jax.random.normal(kx2, (2, 3, 7, 5), dtype=jnp.float32)
    t2 = jax.random.normal(kt2, (2, 3, 7, 5), dtype=jnp.float32)
    _check(x2, t2)

    # Multi-block + 2-way core split + partial last block (row mask gated to
    # the final block only).
    kx3, kt3 = jax.random.split(jax.random.PRNGKey(2))
    x3 = jax.random.normal(kx3, (1, 33, 128, 128), dtype=jnp.float32)
    t3 = jax.random.normal(kt3, (1, 33, 128, 128), dtype=jnp.float32)
    _check(x3, t3)

    # Odd block count: exercises the clamped-duplicate-block skip path.
    kx4, kt4 = jax.random.split(jax.random.PRNGKey(3))
    x4 = jax.random.normal(kx4, (3, 32, 128, 128), dtype=jnp.float32)
    t4 = jax.random.normal(kt4, (3, 32, 128, 128), dtype=jnp.float32)
    _check(x4, t4)

    # bf16 inputs: in-kernel upcast, 16-row sublane packing.
    kx5, kt5 = jax.random.split(jax.random.PRNGKey(4))
    x5 = jax.random.normal(kx5, (2, 8, 32, 32), dtype=jnp.bfloat16)
    t5 = jax.random.normal(kt5, (2, 8, 32, 32), dtype=jnp.bfloat16)
    _check(x5, t5, rtol=1e-4, atol=1e-5)

    print("KERNEL_OK")
</pallas_src>

<mosaic_0001>
module attributes {stable_mosaic.version = 11 : i64} {
  func.func @kernel(%arg0: i32, %arg1: i32, %arg2: memref<16x128xf32, #tpu.memory_space<vmem>>, %arg3: memref<16x128xf32, #tpu.memory_space<vmem>>, %arg4: memref<1x1xf32, #tpu.memory_space<smem>>, %arg5: memref<8x128xf32, #tpu.memory_space<vmem>>) attributes {dimension_semantics = [#tpu.dimension_semantics<parallel>, #tpu.dimension_semantics<arbitrary>], iteration_bounds = array<i64: 1, 1>, scalar_prefetch = 0 : i64, scratch_operands = 1 : i64, tpu.core_type = #tpu.core_type<tc>, window_params = [{transform_indices = @transform_0, window_bounds = array<i64: 16, 128>}, {transform_indices = @transform_1, window_bounds = array<i64: 16, 128>}, {transform_indices = @transform_2, window_bounds = array<i64: 1, 1>}]} {
    %c0_i32 = arith.constant 0 : i32
    %0 = arith.cmpi eq, %arg1, %c0_i32 : i32
    %1 = arith.extui %0 : i1 to i32
    %c0_i32_0 = arith.constant 0 : i32
    %2 = arith.cmpi ne, %1, %c0_i32_0 : i32
    scf.if %2 {
      %cst_10 = arith.constant 0.000000e+00 : f32
      %15 = vector.broadcast %cst_10 : f32 to vector<8x128xf32>
      %c0_11 = arith.constant 0 : index
      %c0_12 = arith.constant 0 : index
      %16 = vector.load %arg5[%c0_11, %c0_12] : memref<8x128xf32, #tpu.memory_space<vmem>>, vector<8x128xf32>
      tpu.vector_store %arg5[%c0_11, %c0_12], %15 {strides = array<i32>} : memref<8x128xf32, #tpu.memory_space<vmem>>, vector<8x128xf32>,
    } else {
    }
    %c0 = arith.constant 0 : index
    %c0_1 = arith.constant 0 : index
    %3 = vector.load %arg2[%c0, %c0_1] : memref<16x128xf32, #tpu.memory_space<vmem>>, vector<16x128xf32>
    %c0_2 = arith.constant 0 : index
    %c0_3 = arith.constant 0 : index
    %4 = vector.load %arg3[%c0_2, %c0_3] : memref<16x128xf32, #tpu.memory_space<vmem>>, vector<16x128xf32>
    %5 = arith.subf %3, %4 : vector<16x128xf32>
    %6 = arith.mulf %5, %5 : vector<16x128xf32>
    %c0_4 = arith.constant 0 : index
    %c0_5 = arith.constant 0 : index
    %7 = vector.load %arg5[%c0_4, %c0_5] : memref<8x128xf32, #tpu.memory_space<vmem>>, vector<8x128xf32>
    %8 = vector.shape_cast %6 : vector<16x128xf32> to vector<2x8x128xf32>
    %cst = arith.constant dense<0.000000e+00> : vector<8x128xf32>
    %9 = vector.multi_reduction <add>, %8, %cst [0] : vector<2x8x128xf32> to vector<8x128xf32>
    %10 = arith.addf %7, %9 : vector<8x128xf32>
    %c0_6 = arith.constant 0 : index
    %c0_7 = arith.constant 0 : index
    %11 = vector.load %arg5[%c0_6, %c0_7] : memref<8x128xf32, #tpu.memory_space<vmem>>, vector<8x128xf32>
    tpu.vector_store %arg5[%c0_6, %c0_7], %10 {strides = array<i32>} : memref<8x128xf32, #tpu.memory_space<vmem>>, vector<8x128xf32>,
    %c0_i32_8 = arith.constant 0 : i32
    %12 = arith.cmpi eq, %arg1, %c0_i32_8 : i32
    %13 = arith.extui %12 : i1 to i32
    %c0_i32_9 = arith.constant 0 : i32
    %14 = arith.cmpi ne, %13, %c0_i32_9 : i32
    scf.if %14 {
      %c0_10 = arith.constant 0 : index
      %c0_11 = arith.constant 0 : index
      %15 = vector.load %arg5[%c0_10, %c0_11] : memref<8x128xf32, #tpu.memory_space<vmem>>, vector<8x128xf32>
      %16 = vector.shape_cast %15 : vector<8x128xf32> to vector<1x8x128xf32>
      %cst_12 = arith.constant dense<0.000000e+00> : vector<1xf32>
      %17 = vector.multi_reduction <add>, %16, %cst_12 [1, 2] : vector<1x8x128xf32> to vector<1xf32>
      %18 = vector.shape_cast %17 : vector<1xf32> to vector<1x1x1xf32>
      %19 = vector.extract %18[0, 0, 0] : f32 from vector<1x1x1xf32>
      %c0_13 = arith.constant 0 : index
      %c0_14 = arith.constant 0 : index
      %20 = memref.load %arg4[%c0_13, %c0_14] : memref<1x1xf32, #tpu.memory_space<smem>>
      memref.store %19, %arg4[%c0_13, %c0_14] : memref<1x1xf32, #tpu.memory_space<smem>>
    } else {
    }
    return
  }
  func.func @transform_0(%arg0: i32, %arg1: i32) -> (i32, i32) {
    %c1_i32 = arith.constant 1 : i32
    %0 = arith.muli %arg0, %c1_i32 : i32
    %1 = arith.addi %0, %arg1 : i32
    %c0_i32 = arith.constant 0 : i32
    %c0_i32_0 = arith.constant 0 : i32
    return %1, %c0_i32 : i32, i32
  }
  func.func @transform_1(%arg0: i32, %arg1: i32) -> (i32, i32) {
    %c1_i32 = arith.constant 1 : i32
    %0 = arith.muli %arg0, %c1_i32 : i32
    %1 = arith.addi %0, %arg1 : i32
    %c0_i32 = arith.constant 0 : i32
    %c0_i32_0 = arith.constant 0 : i32
    return %1, %c0_i32 : i32, i32
  }
  func.func @transform_2(%arg0: i32, %arg1: i32) -> (i32, i32) {
    %c0_i32 = arith.constant 0 : i32
    %c0_i32_0 = arith.constant 0 : i32
    return %arg0, %c0_i32 : i32, i32
  }
}

</mosaic_0001>

<llo_original>
// kernel: tpu_custom_call.1
$region0: #{tpu_custom_call.1}
  #allocation0 [shape = 'u32[]', space=smem, size = 0x4, offset = 0x4, fixed_abs, tag = 'smem constant byte address 0x4 - core index']
  #allocation1 [shape = 'u32[144,128]{1,0:T(1,128)}', space=vmem, size = 0x12000, scoped, tag = 'internal scratch']
  #allocation2 [shape = 'f32[8,128]{1,0:T(8,128)}', space=vmem, size = 0x1000, scoped, tag = 'scratch operand']
  %s0 = inlined_call_operand.hbm [shape: f32[16,128], index: 0, kind: input, shape index: {}]
  %s1 = inlined_call_operand.hbm [shape: f32[16,128], index: 1, kind: input, shape index: {}]
  %s2 = inlined_call_operand.hbm [shape: f32[1,1], index: 2, kind: output, shape index: {}]
  %s3 = sld [smem:[#allocation0]]
  $region34: #{tpu_custom_call.1} parent=0
    _
  %s5 = ssub.s32 1, %s3
  %s6 = scalar_select 0, %s5, %s3
  $region1: #{tpu_custom_call.1} parent=0
    #allocation3 [shape = 'u8[8192]{0}', space=vmem, size = 0x2000, scoped, tag = 'input window, operand 0, single buffered']
    #allocation4 [shape = 's32[1]{0}', space=sflag, size = 0x4, scoped, tag = 'scoped memory for tpu_custom_call.1']
    #allocation5 [shape = 's32[1]{0}', space=sflag, size = 0x4, scoped, tag = 'scoped memory for tpu_custom_call.1']
    #allocation6 [shape = 'u8[8192]{0}', space=vmem, size = 0x2000, scoped, tag = 'input window, operand 1, single buffered']
    #allocation7 [shape = 's32[1]{0}', space=sflag, size = 0x4, scoped, tag = 'scoped memory for tpu_custom_call.1']
    #allocation8 [shape = 'u8[512]{0}', space=smem, size = 0x200, scoped, tag = 'output window, operand 0, single buffered']
    %7 = vsyncpa [#allocation4], 0
    %8 = vsyncpa [#allocation7], 0
    %9 = vsyncpa [#allocation5], 0
    // Predicated region
    $region2: #{tpu_custom_call.1} parent=1 // pred_check
      _
    $region3: #{tpu_custom_call.1} parent=1 // pred_check_branch
      %11 = sbr.rel (0) target = $region5
    $region4: #{tpu_custom_call.1} parent=1 // pred_region
      %s12 = sadd.s32 0, 0
      %s13 = smul.u32 2, %s12
      %s15 = ssub.s32 256, 256
      %16 = vsyncadd [#allocation4], %s15
      %s17 = smul.addr %s13, 128
      %s18 = scalar_lea.hbm %s0, %s17
      %s19 = sshll.u32 [#allocation3], 4
      %s20 = int_to_ptr.vmem [resolvable:$true] %s19
      %25 = dma.hbm_to_vmem [thread:$0]  %s18, 256, %s20, [#allocation4], 128, 128, 8
    $region5: #{tpu_custom_call.1} parent=1 // pred_fallthru
      _
    // Predicated region
    $region6: #{tpu_custom_call.1} parent=1 // pred_check
      _
    $region7: #{tpu_custom_call.1} parent=1 // pred_check_branch
      %27 = sbr.rel (0) target = $region9
    $region8: #{tpu_custom_call.1} parent=1 // pred_region
      %s28 = sadd.s32 0, 0
      %s29 = smul.u32 2, %s28
      %s31 = ssub.s32 256, 256
      %32 = vsyncadd [#allocation7], %s31
      %s33 = smul.addr %s29, 128
      %s34 = scalar_lea.hbm %s1, %s33
      %s35 = sshll.u32 [#allocation6], 4
      %s36 = int_to_ptr.vmem [resolvable:$true] %s35
      %41 = dma.hbm_to_vmem [thread:$0]  %s34, 256, %s36, [#allocation7], 128, 128, 8
    $region9: #{tpu_custom_call.1} parent=1 // pred_fallthru
      _
    // Predicated region
    $region10: #{tpu_custom_call.1} parent=1 // pred_check
      _
    $region11: #{tpu_custom_call.1} parent=1 // pred_check_branch
      %43 = sbr.rel (0) target = $region13
    $region12: #{tpu_custom_call.1} parent=1 // pred_region
      %44 = dma.done [#allocation4], 256
    $region13: #{tpu_custom_call.1} parent=1 // pred_fallthru
      _
    // Predicated region
    $region14: #{tpu_custom_call.1} parent=1 // pred_check
      _
    $region15: #{tpu_custom_call.1} parent=1 // pred_check_branch
      %46 = sbr.rel (0) target = $region17
    $region16: #{tpu_custom_call.1} parent=1 // pred_region
      %47 = dma.done [#allocation7], 256
    $region17: #{tpu_custom_call.1} parent=1 // pred_fallthru
      _
    %s48 = sadd.s32 0, 0
    %s49 = smul.u32 2, %s48
    %s50 = sadd.s32 0, 0
    %s51 = smul.u32 2, %s50
    %p52 = scmp.eq.s32.totalorder 0, 0
    // Predicated region
    $region18: #{tpu_custom_call.1} parent=1 // pred_check
      %p53 = pneg %p52
    $region19: #{tpu_custom_call.1} parent=1 // pred_check_branch
      %55 = sbr.rel (%p53) target = $region21
    $region20: #{tpu_custom_call.1} parent=1 // pred_region
      %56 = vst [vmem:[#allocation2] sm:$0xff] 0.0
    $region21: #{tpu_custom_call.1} parent=1 // pred_fallthru
      _
    %v57 = vld [vmem:[#allocation3] sm:$0xff]
    %v58 = vld [vmem:[#allocation3 + $0x8] sm:$0xff]
    %v59 = vld [vmem:[#allocation6] sm:$0xff]
    %v60 = vld [vmem:[#allocation6 + $0x8] sm:$0xff]
    %v61 = vsub.f32 %v57, %v59
    %v62 = vsub.f32 %v58, %v60
    %v63 = vmul.f32 %v61, %v61
    %v64 = vmul.f32 %v62, %v62
    %v65 = vld [vmem:[#allocation2] sm:$0xff]
    %v66 = vadd.f32 %v63, %v64
    %v67 = vadd.f32 %v65, %v66
    %68 = vst [vmem:[#allocation2] sm:$0xff] %v67
    // Predicated region
    $region22: #{tpu_custom_call.1} parent=1 // pred_check
      %p69 = pneg %p52
    $region23: #{tpu_custom_call.1} parent=1 // pred_check_branch
      %71 = sbr.rel (%p69) target = $region25
    $region24: #{tpu_custom_call.1} parent=1 // pred_region
      %v72 = vld [vmem:[#allocation2] sm:$0xff]
      %73 = vadd.xlane.f32.xlu0 %v72
      %v74 = vpop.xlane.xlu0 %73
      %v75 = vrot.slane %v74, 4
      %v76 = vadd.f32 %v74, %v75
      %v77 = vrot.slane %v76, 2
      %v78 = vadd.f32 %v76, %v77
      %v79 = vrot.slane %v78, 1
      %v80 = vadd.f32 %v78, %v79
      %s81 = vtos %v80
      %s82 = scalar_lea.smem [#allocation8], 0
      %83 = sst [smem:[%s82]] %s81
    $region25: #{tpu_custom_call.1} parent=1 // pred_fallthru
      _
    // Predicated region
    $region26: #{tpu_custom_call.1} parent=1 // pred_check
      _
    $region27: #{tpu_custom_call.1} parent=1 // pred_check_branch
      %85 = sbr.rel (0) target = $region29
    $region28: #{tpu_custom_call.1} parent=1 // pred_region
      %s87 = ssub.s32 16, 16
      %88 = vsyncadd [#allocation5], %s87
      %91 = dma.smem_to_hbm [#allocation8], 16, %s2, [#allocation5]
    $region29: #{tpu_custom_call.1} parent=1 // pred_fallthru
      _
    // Predicated region
    $region30: #{tpu_custom_call.1} parent=1 // pred_check
      _
    $region31: #{tpu_custom_call.1} parent=1 // pred_check_branch
      %93 = sbr.rel (0) target = $region33
    $region32: #{tpu_custom_call.1} parent=1 // pred_region
      %94 = dma.done [#allocation5], 16
    $region33: #{tpu_custom_call.1} parent=1 // pred_fallthru
      _
    %95 = sfence
    %96 = vsyncpa [#allocation4], 1
    %97 = vsyncpa [#allocation7], 1
    %98 = vsyncpa [#allocation5], 1

</llo_original>
